<compile_context>
chip_gen: v7x
topology: tpu7x:2x2x1
jax: 0.10.0
libtpu: 0.0.40
codegen_flags: <defaults>
</compile_context>

<pallas_src>
import functools

import jax
import jax.numpy as jnp
from jax.experimental import pallas as pl
from jax.experimental.pallas import tpu as pltpu

_LANE = 128      # vreg lane width (last dim)
_SUBLANE = 8     # vreg sublane count for f32 (second-to-last dim)

# ~4 MiB of VMEM per pipeline buffer: big enough to amortize per-grid-step
# overhead against v6e/v7x HBM bandwidth, small enough that the 4 live buffers
# (in + out, double-buffered) stay ~16 MiB, comfortably under the explicit
# 48 MiB VMEM limit we request (safe on v7x's 64 MiB physical VMEM and on
# v5e/v6e's 128 MiB physical VMEM).
_DEFAULT_TILE_BYTES = 4 * 1024 * 1024
_VMEM_LIMIT_BYTES = 48 * 1024 * 1024


def _temp_scale_kernel(temp_ref, x_ref, o_ref):
    # temp_ref: (1,) f32 in SMEM (scalar prefetch); x/o: (tile_m, lanes) VMEM.
    # Hoist the reciprocal once; per-vreg work is then a single VPU multiply.
    inv_t = 1.0 / temp_ref[0]
    o_ref[...] = x_ref[...] * inv_t


def _cdiv(a: int, b: int) -> int:
    return -(-a // b)


def _row_tile(num_rows: int, vmem_bytes_per_row: int, target_tile_bytes: int) -> int:
    """Pick a row tile: multiple of 8 sublanes, ~target_tile_bytes of VMEM,
    and (when possible) at least 2 grid steps so both v7x TensorCores work."""
    if num_rows <= _SUBLANE:
        return num_rows                       # single block == full dim (layout-legal)
    max_rows = max(_SUBLANE, target_tile_bytes // max(vmem_bytes_per_row, 1))
    tile = min(num_rows, max_rows)
    tile = max(_SUBLANE, (tile // _SUBLANE) * _SUBLANE)
    # Guarantee >= 2 grid steps (megacore sharding) when there are enough rows.
    if tile >= num_rows and num_rows >= 2 * _SUBLANE:
        tile = max(_SUBLANE, (_cdiv(num_rows, 2) // _SUBLANE) * _SUBLANE)
    return tile


def _scale_2d(x2d: jax.Array, temperature: jax.Array, tile_rows: int) -> jax.Array:
    rows, lanes = x2d.shape
    num_tiles = _cdiv(rows, tile_rows)        # ragged last block handled by Pallas
    return pl.pallas_call(
        _temp_scale_kernel,
        out_shape=jax.ShapeDtypeStruct((rows, lanes), x2d.dtype),
        grid_spec=pltpu.PrefetchScalarGridSpec(
            num_scalar_prefetch=1,            # temperature -> SMEM
            grid=(num_tiles,),
            in_specs=[pl.BlockSpec((tile_rows, lanes), lambda i, temp: (i, 0))],
            out_specs=pl.BlockSpec((tile_rows, lanes), lambda i, temp: (i, 0)),
        ),
        compiler_params=pltpu.CompilerParams(
            dimension_semantics=("parallel",),          # megacore sharding on v7x
            vmem_limit_bytes=_VMEM_LIMIT_BYTES,
        ),
    )(temperature, x2d)


@functools.partial(jax.jit, static_argnames=("target_tile_bytes",))
def temperature_scale(logits: jax.Array, temperature: jax.Array,
                      *, target_tile_bytes: int = _DEFAULT_TILE_BYTES) -> jax.Array:
    """Pallas equivalent of ModelWithTemperature.temperature_scale.

    logits:      [N, C] float32
    temperature: [1]    float32 (broadcast over all elements, like the PyTorch
                 unsqueeze(1).expand(N, C))
    """
    N, C = logits.shape
    total = N * C
    itemsize = jnp.dtype(logits.dtype).itemsize

    if total % _LANE == 0:
        # Fast path: free reshape view to a lane-dense [rows, 128] slab.
        # No padding, no slicing, fully unmasked stores.
        rows = total // _LANE
        tile = _row_tile(rows, _LANE * itemsize, target_tile_bytes)
        out = _scale_2d(logits.reshape(rows, _LANE), temperature, tile)
        return out.reshape(N, C)

    # General path: operate on [N, C] directly, full class dim as the (possibly
    # masked) lane axis.  Zero pad/slice HBM round-trips; each tile is a
    # contiguous HBM chunk.  VMEM footprint per row is lane-padded C.
    vmem_per_row = _cdiv(C, _LANE) * _LANE * itemsize
    tile = _row_tile(N, vmem_per_row, target_tile_bytes)
    return _scale_2d(logits, temperature, tile)


class ModelWithTemperatureJAX:
    """JAX/Pallas port of the PyTorch ModelWithTemperature decorator."""

    def __init__(self):
        # nn.Parameter(torch.ones(1) * 1.5)
        self.temperature = jnp.ones((1,), dtype=jnp.float32) * 1.5

    def temperature_scale(self, logits: jax.Array) -> jax.Array:
        return temperature_scale(logits, self.temperature)

    def __call__(self, logits: jax.Array) -> jax.Array:
        # forward(): logits = self.model(input); return temperature_scale(logits)
        # (wrapped model is external; logits are passed in directly)
        return self.temperature_scale(logits)


if __name__ == "__main__":
    k1, k2, k3 = jax.random.split(jax.random.PRNGKey(0), 3)
    model = ModelWithTemperatureJAX()

    # 1) Small shape, fast (lane-dense reshape) path: 8 samples, 32 classes.
    N, C = 8, 32
    logits = jax.random.normal(k1, (N, C), dtype=jnp.float32)
    out = jax.block_until_ready(model(logits))
    ref = logits / model.temperature[0]
    assert out.shape == (N, C)
    assert jnp.allclose(out, ref, atol=1e-6, rtol=1e-5)

    # 2) Awkward shape (total not divisible by 128): general [N, C] path with
    #    a ragged last grid block and masked lane tail — no pad/slice.
    N2, C2 = 257, 129
    logits2 = jax.random.normal(k2, (N2, C2), dtype=jnp.float32)
    out2 = jax.block_until_ready(temperature_scale(logits2, model.temperature))
    ref2 = logits2 / model.temperature[0]
    assert out2.shape == (N2, C2)
    assert jnp.allclose(out2, ref2, atol=1e-6, rtol=1e-5)

    # 3) Fast path with a tiny tile budget to exercise a multi-step pipelined
    #    grid (and the >= 2 step megacore split).
    N3, C3 = 64, 128
    logits3 = jax.random.normal(k3, (N3, C3), dtype=jnp.float32)
    out3 = jax.block_until_ready(
        temperature_scale(logits3, model.temperature, target_tile_bytes=4096))
    ref3 = logits3 / model.temperature[0]
    assert out3.shape == (N3, C3)
    assert jnp.allclose(out3, ref3, atol=1e-6, rtol=1e-5)

    print("KERNEL_OK")
</pallas_src>

<mosaic_0001>
module attributes {stable_mosaic.version = 11 : i64} {
  func.func @_temp_scale_kernel(%arg0: i32, %arg1: memref<1xf32, #tpu.memory_space<smem>>, %arg2: memref<2x128xf32, #tpu.memory_space<vmem>>, %arg3: memref<2x128xf32, #tpu.memory_space<vmem>>) attributes {dimension_semantics = [#tpu.dimension_semantics<parallel>], iteration_bounds = array<i64: 1>, scalar_prefetch = 1 : i64, scratch_operands = 0 : i64, tpu.core_type = #tpu.core_type<tc>, window_params = [{transform_indices = @transform_0, window_bounds = array<i64: 2, 128>}, {transform_indices = @transform_1, window_bounds = array<i64: 2, 128>}]} {
    %c0 = arith.constant 0 : index
    %0 = memref.load %arg1[%c0] : memref<1xf32, #tpu.memory_space<smem>>
    %cst = arith.constant 1.000000e+00 : f32
    %1 = arith.divf %cst, %0 : f32
    %c0_0 = arith.constant 0 : index
    %c0_1 = arith.constant 0 : index
    %2 = vector.load %arg2[%c0_0, %c0_1] : memref<2x128xf32, #tpu.memory_space<vmem>>, vector<2x128xf32>
    %3 = vector.broadcast %1 : f32 to vector<2x128xf32>
    %4 = arith.mulf %2, %3 : vector<2x128xf32>
    %c0_2 = arith.constant 0 : index
    %c0_3 = arith.constant 0 : index
    %5 = vector.load %arg3[%c0_2, %c0_3] : memref<2x128xf32, #tpu.memory_space<vmem>>, vector<2x128xf32>
    tpu.vector_store %arg3[%c0_2, %c0_3], %4 {strides = array<i32>} : memref<2x128xf32, #tpu.memory_space<vmem>>, vector<2x128xf32>,
    return
  }
  func.func @transform_0(%arg0: i32, %arg1: memref<1xf32, #tpu.memory_space<smem>>) -> (i32, i32) {
    %c0_i32 = arith.constant 0 : i32
    %c0_i32_0 = arith.constant 0 : i32
    return %arg0, %c0_i32 : i32, i32
  }
  func.func @transform_1(%arg0: i32, %arg1: memref<1xf32, #tpu.memory_space<smem>>) -> (i32, i32) {
    %c0_i32 = arith.constant 0 : i32
    %c0_i32_0 = arith.constant 0 : i32
    return %arg0, %c0_i32 : i32, i32
  }
}

</mosaic_0001>

<llo_original>
// kernel: temperature_scale.1
$region0: #{temperature_scale.1}
  #allocation0 [shape = 'u32[]', space=smem, size = 0x4, offset = 0x4, fixed_abs, tag = 'smem constant byte address 0x4 - core index']
  #allocation1 [shape = 'u32[144,128]{1,0:T(1,128)}', space=vmem, size = 0x12000, scoped, tag = 'internal scratch']
  #allocation2 [shape = 's32[1]{0}', space=sflag, size = 0x4, scoped, tag = 'scoped memory for temperature_scale.1']
  #allocation3 [shape = 'f32[1]{0:T(128)S(6)}', space=smem, size = 0x200, scoped, tag = 'prefetched SMEM operand 0']
  %s0 = inlined_call_operand.<no memory space> [shape: f32[1], index: 0, kind: input, shape index: {}]
  %s1 = inlined_call_operand.vmem [shape: f32[2,128], index: 1, kind: input, shape index: {}]
  %s2 = inlined_call_operand.vmem [shape: f32[2,128], index: 2, kind: output, shape index: {}]
  %s3 = sld [smem:[#allocation0]]
  $region14: #{temperature_scale.1} parent=0
    _
  %s5 = ssub.s32 1, %s3
  %s6 = scalar_select 0, %s5, %s3
  %7 = sst [smem:[#allocation3]] %s0
  // Predicated region
  $region2: #{temperature_scale.1} parent=0 // pred_check
    _
  $region3: #{temperature_scale.1} parent=0 // pred_check_branch
    %9 = sbr.rel (0) target = $region5
  $region4: #{temperature_scale.1} parent=0 // pred_region
    _
  $region5: #{temperature_scale.1} parent=0 // pred_fallthru
    _
  %s10 = sld [smem:[#allocation3]]
  %v11 = vstv %s10
  %v12 = vrcp.pop %v11
  %s13 = vtos %v12
  %v14 = vld [vmem:[%s1] sm:$0x3]
  %v15 = vstv %s13
  %v16 = vmul.f32 %v14, %v15
  %17 = vst [vmem:[%s2] sm:$0x3] %v16
  // Predicated region
  $region6: #{temperature_scale.1} parent=0 // pred_check
    _
  $region7: #{temperature_scale.1} parent=0 // pred_check_branch
    %19 = sbr.rel (0) target = $region9
  $region8: #{temperature_scale.1} parent=0 // pred_region
    _
  $region9: #{temperature_scale.1} parent=0 // pred_fallthru
    _
  // Predicated region
  $region10: #{temperature_scale.1} parent=0 // pred_check
    _
  $region11: #{temperature_scale.1} parent=0 // pred_check_branch
    %21 = sbr.rel (0) target = $region13
  $region12: #{temperature_scale.1} parent=0 // pred_region
    _
  $region13: #{temperature_scale.1} parent=0 // pred_fallthru
    _

</llo_original>
